<compile_context>
chip_gen: v7x
topology: tpu7x:2x2x1
jax: 0.10.0
libtpu: 0.0.40
codegen_flags: <defaults>
</compile_context>

<pallas_src>
import functools

import jax
import jax.numpy as jnp
from jax import lax
from jax.experimental import pallas as pl
from jax.experimental.pallas import tpu as pltpu


# ---------------------------------------------------------------------------
# Helpers
# ---------------------------------------------------------------------------

def _cdiv(a, b):
    return -(-a // b)


def _round_up_pow2(n):
    n = max(int(n), 1)
    return 1 << (n - 1).bit_length()


def _round_down_pow2(n):
    n = max(int(n), 1)
    return 1 << (n.bit_length() - 1)


def _pick_tile_d(block_rows, d, hw, f32_budget_bytes):
    """Column-tile width: 128 * 2^m, capped by an f32-footprint block budget."""
    need = _round_up_pow2(_cdiv(d + hw, 128))      # enough to cover the output row
    cap = _round_down_pow2(max(1, f32_budget_bytes // (block_rows * 128 * 4)))
    return 128 * max(1, min(need, cap))


def _lane_fold_128(v):
    """Sum (..., rows, W) with W = 128 * 2^m down to (..., rows, 128).

    Pairwise halving along lanes: 128-aligned slices are free views and the
    adds run on the VPU at full lane width (no per-tile cross-lane XLU reduce).
    """
    w = v.shape[-1]
    while w > 128:
        half = w // 2
        v = v[..., :half] + v[..., half:]
        w = half
    return v


# ---------------------------------------------------------------------------
# Kernel bodies
# ---------------------------------------------------------------------------

def _mbstd_kernel_grouped(x_ref, o_ref, acc_ref, *, n_x, d, tile_d, inv_g,
                          inv_d, eps):
    """Blocks (g, rows, tile_d); group reduction = plain sum over axis 0.

    Used when the slot axis is sublane-aligned (rows % 8 == 0) or tiny.
    """
    k = pl.program_id(1)

    def group_std(xb):
        xf = xb.astype(jnp.float32)                           # (g, rows, T)
        mean = jnp.sum(xf, axis=0, keepdims=True) * inv_g
        xc = xf - mean                                        # exact centered form
        var = jnp.sum(xc * xc, axis=0) * inv_g                # (rows, T)
        return jnp.sqrt(var + eps)

    def stat_rows():
        # Single cross-lane reduction, only at finalize.
        return jnp.sum(acc_ref[...], axis=-1, keepdims=True) * inv_d   # (rows, 1)

    @pl.when(k == 0)
    def _init():
        acc_ref[...] = jnp.zeros_like(acc_ref)

    @pl.when(k < n_x - 1)
    def _interior_x_tile():
        xb = x_ref[...]
        o_ref[...] = xb                                       # fused concat pass-through
        acc_ref[...] += _lane_fold_128(group_std(xb))

    @pl.when(k == n_x - 1)
    def _last_x_tile():
        xb = x_ref[...]
        std = group_std(xb)                                   # (rows, T)
        col = (n_x - 1) * tile_d + lax.broadcasted_iota(jnp.int32, std.shape, 1)
        in_x = col < d                                        # mask for partial x tile
        acc_ref[...] += _lane_fold_128(jnp.where(in_x, std, 0.0))
        stat = stat_rows()                                    # full sum ready now
        fill = jnp.broadcast_to(stat[None, :, :], xb.shape).astype(o_ref.dtype)
        o_ref[...] = jnp.where(in_x[None, :, :], xb, fill)

    @pl.when(k >= n_x)
    def _std_channel_tile():
        stat = stat_rows()
        o_ref[...] = jnp.broadcast_to(stat[None, :, :], o_ref.shape).astype(o_ref.dtype)


def _mbstd_kernel_rolls(x_ref, o_ref, acc_ref, *, n_x, d, tile_d, g, g2,
                        inv_g, inv_d, eps):
    """Blocks (bs, tile_d); group reduction via circular sublane rolls (XLU).

    Keeps the VPU at full sublane occupancy when the slot count g2 is small;
    every row ends up holding its own group's statistics.
    """
    k = pl.program_id(0)

    def group_std(xb):
        xf = xb.astype(jnp.float32)                           # (bs, T)
        s1 = xf
        for r in range(1, g):
            s1 = s1 + pltpu.roll(xf, shift=r * g2, axis=0)
        mean = s1 * inv_g
        xc = xf - mean                                        # exact centered form
        xc2 = xc * xc
        s2 = xc2
        for r in range(1, g):
            s2 = s2 + pltpu.roll(xc2, shift=r * g2, axis=0)
        return jnp.sqrt(s2 * inv_g + eps)                     # (bs, T)

    def stat_rows():
        return jnp.sum(acc_ref[...], axis=-1, keepdims=True) * inv_d   # (bs, 1)

    @pl.when(k == 0)
    def _init():
        acc_ref[...] = jnp.zeros_like(acc_ref)

    @pl.when(k < n_x - 1)
    def _interior_x_tile():
        xb = x_ref[...]
        o_ref[...] = xb
        acc_ref[...] += _lane_fold_128(group_std(xb))

    @pl.when(k == n_x - 1)
    def _last_x_tile():
        xb = x_ref[...]
        std = group_std(xb)
        col = (n_x - 1) * tile_d + lax.broadcasted_iota(jnp.int32, std.shape, 1)
        in_x = col < d
        acc_ref[...] += _lane_fold_128(jnp.where(in_x, std, 0.0))
        stat = stat_rows()
        fill = jnp.broadcast_to(stat, xb.shape).astype(o_ref.dtype)
        o_ref[...] = jnp.where(in_x, xb, fill)

    @pl.when(k >= n_x)
    def _std_channel_tile():
        stat = stat_rows()
        o_ref[...] = jnp.broadcast_to(stat, o_ref.shape).astype(o_ref.dtype)


# ---------------------------------------------------------------------------
# Wrapper
# ---------------------------------------------------------------------------

def minibatch_std(x, group_size=4, *, tile_budget_bytes=4 << 20):
    """Pallas TPU implementation of MinibatchStd.forward for NCHW input x."""
    bs, c, h, w = x.shape
    assert bs % group_size == 0, "batch must be divisible by group_size"
    g = min(group_size, bs)
    g2 = bs // g
    hw = h * w
    d = c * hw
    dtype = x.dtype
    eps = 1e-8
    inv_g = 1.0 / g
    inv_d = 1.0 / d

    use_split = (g2 % 16 == 0)                    # 2-way slot split (v7x megacore)
    use_rolls = (not use_split) and (g2 % 8 != 0) and (bs % 8 == 0) and g > 1

    if use_rolls:
        # Flat (bs, D) layout: full sublane occupancy for small slot counts.
        x_v = x.reshape(bs, d)
        out_struct = jax.ShapeDtypeStruct((bs, d + hw), dtype)
        block_rows = bs
        tile_d = _pick_tile_d(block_rows, d, hw, tile_budget_bytes)
        n_x = _cdiv(d, tile_d)
        n_total = _cdiv(d + hw, tile_d)
        kernel = functools.partial(
            _mbstd_kernel_rolls, n_x=n_x, d=d, tile_d=tile_d, g=g, g2=g2,
            inv_g=inv_g, inv_d=inv_d, eps=eps)
        grid = (n_total,)
        in_specs = [pl.BlockSpec(
            (bs, tile_d),
            # Clamp: trailing std-channel steps re-see the last x tile, which
            # the pipeline then skips re-fetching.
            lambda k: (0, jnp.minimum(k, n_x - 1)))]
        out_specs = pl.BlockSpec((bs, tile_d), lambda k: (0, k))
        scratch = [pltpu.VMEM((bs, 128), jnp.float32)]
        dims = ("arbitrary",)
    else:
        # Grouped (g, g2, D) layout; optional 2-way slot split across cores.
        # TODO(synk): when g2 < 16 on v7x this path uses a single TensorCore;
        # a column split with a cross-core combine could use both.
        n_j = 2 if use_split else 1
        g2_t = g2 // n_j
        x_v = x.reshape(g, g2, d)
        out_struct = jax.ShapeDtypeStruct((g, g2, d + hw), dtype)
        block_rows = g * g2_t
        tile_d = _pick_tile_d(block_rows, d, hw, tile_budget_bytes)
        n_x = _cdiv(d, tile_d)
        n_total = _cdiv(d + hw, tile_d)
        kernel = functools.partial(
            _mbstd_kernel_grouped, n_x=n_x, d=d, tile_d=tile_d,
            inv_g=inv_g, inv_d=inv_d, eps=eps)
        grid = (n_j, n_total)
        in_specs = [pl.BlockSpec(
            (g, g2_t, tile_d),
            lambda j, k: (0, j, jnp.minimum(k, n_x - 1)))]
        out_specs = pl.BlockSpec((g, g2_t, tile_d), lambda j, k: (0, j, k))
        scratch = [pltpu.VMEM((g2_t, 128), jnp.float32)]
        dims = ("parallel", "arbitrary")

    # Honest VMEM accounting: in + out blocks double-buffered, plus a
    # conservative allowance for the kernel's f32 intermediates.
    # (If a profile shows exposed input DMA on v7x, pipeline_mode=pl.Buffered(3)
    #  on the input spec is the next lever; budget one extra block for it.)
    io_block_bytes = block_rows * tile_d * dtype.itemsize
    f32_block_bytes = block_rows * tile_d * 4
    vmem_limit = int(4 * io_block_bytes + 8 * f32_block_bytes + (2 << 20))
    vmem_limit = min(max(vmem_limit, 32 << 20), 56 << 20)

    cost = pl.CostEstimate(
        flops=int(8 * bs * d),
        transcendentals=int(g2 * d),
        bytes_accessed=int(bs * (2 * d + hw) * dtype.itemsize),
    )

    out = pl.pallas_call(
        kernel,
        out_shape=out_struct,
        grid_spec=pltpu.PrefetchScalarGridSpec(
            num_scalar_prefetch=0,
            grid=grid,
            in_specs=in_specs,
            out_specs=out_specs,
            scratch_shapes=scratch,
        ),
        compiler_params=pltpu.CompilerParams(
            dimension_semantics=dims,
            vmem_limit_bytes=vmem_limit,
        ),
        cost_estimate=cost,
    )(x_v)

    return out.reshape(bs, c + 1, h, w)


# ---------------------------------------------------------------------------
# Pure-JAX reference (matches the PyTorch forward exactly)
# ---------------------------------------------------------------------------

def _minibatch_std_reference(x, group_size=4):
    bs, c, h, w = x.shape
    g = min(group_size, bs)
    xf = x.astype(jnp.float32)
    y = xf.reshape(g, -1, c, h, w)
    y = y - jnp.mean(y, axis=0, keepdims=True)
    y = jnp.mean(jnp.square(y), axis=0)
    y = jnp.sqrt(y + 1e-8)
    y = jnp.mean(y, axis=(1, 2, 3), keepdims=True)          # (bs//g, 1, 1, 1)
    y = jnp.tile(y, (g, 1, h, w))                            # (bs, 1, h, w)
    return jnp.concatenate([xf, y], axis=1).astype(x.dtype)


def _check(name, x, group_size=4, tol=1e-4, atol=1e-5, **kw):
    out = jax.block_until_ready(minibatch_std(x, group_size, **kw))
    ref = _minibatch_std_reference(x, group_size)
    bs, c, h, w = x.shape
    assert out.shape == (bs, c + 1, h, w), (name, out.shape)
    ok = jnp.allclose(out.astype(jnp.float32), ref.astype(jnp.float32),
                      rtol=tol, atol=atol)
    assert ok, f"mismatch: {name}"


if __name__ == "__main__":
    key = jax.random.PRNGKey(0)
    ks = jax.random.split(key, 8)

    # 1) roll path (g2=2), single (partial) column tile.
    _check("roll/single-tile",
           jax.random.normal(ks[0], (8, 4, 16, 16), dtype=jnp.float32))

    # 2) roll path, multiple interior x tiles + trailing std-channel tile.
    _check("roll/multi-tile+tail",
           jax.random.normal(ks[1], (8, 10, 16, 16), dtype=jnp.float32),
           tile_budget_bytes=16 * 1024)

    # 3) roll path, tile width does not divide D (masked straddling tile).
    _check("roll/partial-last-tile",
           jax.random.normal(ks[2], (8, 9, 16, 16), dtype=jnp.float32),
           tile_budget_bytes=16 * 1024)

    # 4) grouped path (g2=8, sublane-aligned), single core.
    _check("grouped/aligned",
           jax.random.normal(ks[3], (32, 4, 8, 8), dtype=jnp.float32))

    # 5) grouped path with 2-way parallel slot split (g2=16).
    _check("grouped/split",
           jax.random.normal(ks[4], (64, 4, 8, 8), dtype=jnp.float32))

    # 6) grouped fallback for non-8-aligned batch (g2=3).
    _check("grouped/odd-batch",
           jax.random.normal(ks[5], (12, 4, 8, 8), dtype=jnp.float32))

    # 7) bf16 input on the roll path (looser tolerance for the bf16 cast).
    _check("roll/bf16",
           jax.random.normal(ks[6], (8, 4, 16, 16), dtype=jnp.bfloat16),
           tol=2e-2, atol=2e-2)

    print("KERNEL_OK")
</pallas_src>

<mosaic_0001>
module attributes {stable_mosaic.version = 11 : i64} {
  func.func @_mbstd_kernel_rolls(%arg0: i32, %arg1: memref<8x2048xf32, #tpu.memory_space<vmem>>, %arg2: memref<8x2048xf32, #tpu.memory_space<vmem>>, %arg3: memref<8x128xf32, #tpu.memory_space<vmem>>) attributes {dimension_semantics = [#tpu.dimension_semantics<arbitrary>], iteration_bounds = array<i64: 1>, scalar_prefetch = 0 : i64, scratch_operands = 1 : i64, tpu.core_type = #tpu.core_type<tc>, window_params = [{transform_indices = @transform_0, window_bounds = array<i64: 8, 2048>}, {transform_indices = @transform_1, window_bounds = array<i64: 8, 2048>}]} {
    %c0_i32 = arith.constant 0 : i32
    %0 = arith.cmpi eq, %arg0, %c0_i32 : i32
    %1 = arith.extui %0 : i1 to i32
    %c0_i32_0 = arith.constant 0 : i32
    %2 = arith.cmpi ne, %1, %c0_i32_0 : i32
    scf.if %2 {
      %cst = arith.constant 0.000000e+00 : f32
      %12 = vector.broadcast %cst : f32 to vector<8x128xf32>
      %c0 = arith.constant 0 : index
      %c0_6 = arith.constant 0 : index
      %13 = vector.load %arg3[%c0, %c0_6] : memref<8x128xf32, #tpu.memory_space<vmem>>, vector<8x128xf32>
      tpu.vector_store %arg3[%c0, %c0_6], %12 {strides = array<i32>} : memref<8x128xf32, #tpu.memory_space<vmem>>, vector<8x128xf32>,
    } else {
    }
    %c0_i32_1 = arith.constant 0 : i32
    %3 = arith.cmpi slt, %arg0, %c0_i32_1 : i32
    %4 = arith.extui %3 : i1 to i32
    %c0_i32_2 = arith.constant 0 : i32
    %5 = arith.cmpi ne, %4, %c0_i32_2 : i32
    scf.if %5 {
      %c0 = arith.constant 0 : index
      %c0_6 = arith.constant 0 : index
      %12 = vector.load %arg1[%c0, %c0_6] : memref<8x2048xf32, #tpu.memory_space<vmem>>, vector<8x2048xf32>
      %c0_7 = arith.constant 0 : index
      %c0_8 = arith.constant 0 : index
      %13 = vector.load %arg2[%c0_7, %c0_8] : memref<8x2048xf32, #tpu.memory_space<vmem>>, vector<8x2048xf32>
      tpu.vector_store %arg2[%c0_7, %c0_8], %12 {strides = array<i32>} : memref<8x2048xf32, #tpu.memory_space<vmem>>, vector<8x2048xf32>,
      %c0_9 = arith.constant 0 : index
      %c0_10 = arith.constant 0 : index
      %14 = vector.load %arg3[%c0_9, %c0_10] : memref<8x128xf32, #tpu.memory_space<vmem>>, vector<8x128xf32>
      %c2_i32 = arith.constant 2 : i32
      %15 = tpu.dynamic_rotate %12 by %c2_i32 dim 0 : vector<8x2048xf32>, i32 -> vector<8x2048xf32>
      %16 = arith.addf %12, %15 : vector<8x2048xf32>
      %c4_i32 = arith.constant 4 : i32
      %17 = tpu.dynamic_rotate %12 by %c4_i32 dim 0 : vector<8x2048xf32>, i32 -> vector<8x2048xf32>
      %18 = arith.addf %16, %17 : vector<8x2048xf32>
      %c6_i32 = arith.constant 6 : i32
      %19 = tpu.dynamic_rotate %12 by %c6_i32 dim 0 : vector<8x2048xf32>, i32 -> vector<8x2048xf32>
      %20 = arith.addf %18, %19 : vector<8x2048xf32>
      %cst = arith.constant 2.500000e-01 : f32
      %21 = vector.broadcast %cst : f32 to vector<8x2048xf32>
      %22 = arith.mulf %20, %21 : vector<8x2048xf32>
      %23 = arith.subf %12, %22 : vector<8x2048xf32>
      %24 = arith.mulf %23, %23 : vector<8x2048xf32>
      %c2_i32_11 = arith.constant 2 : i32
      %25 = tpu.dynamic_rotate %24 by %c2_i32_11 dim 0 : vector<8x2048xf32>, i32 -> vector<8x2048xf32>
      %26 = arith.addf %24, %25 : vector<8x2048xf32>
      %c4_i32_12 = arith.constant 4 : i32
      %27 = tpu.dynamic_rotate %24 by %c4_i32_12 dim 0 : vector<8x2048xf32>, i32 -> vector<8x2048xf32>
      %28 = arith.addf %26, %27 : vector<8x2048xf32>
      %c6_i32_13 = arith.constant 6 : i32
      %29 = tpu.dynamic_rotate %24 by %c6_i32_13 dim 0 : vector<8x2048xf32>, i32 -> vector<8x2048xf32>
      %30 = arith.addf %28, %29 : vector<8x2048xf32>
      %cst_14 = arith.constant 2.500000e-01 : f32
      %31 = vector.broadcast %cst_14 : f32 to vector<8x2048xf32>
      %32 = arith.mulf %30, %31 : vector<8x2048xf32>
      %cst_15 = arith.constant 9.99999993E-9 : f32
      %33 = vector.broadcast %cst_15 : f32 to vector<8x2048xf32>
      %34 = arith.addf %32, %33 : vector<8x2048xf32>
      %35 = math.sqrt %34 : vector<8x2048xf32>
      %36 = vector.extract_strided_slice %35 {offsets = [0, 0], sizes = [8, 1024], strides = [1, 1]} : vector<8x2048xf32> to vector<8x1024xf32>
      %37 = vector.extract_strided_slice %35 {offsets = [0, 1024], sizes = [8, 1024], strides = [1, 1]} : vector<8x2048xf32> to vector<8x1024xf32>
      %38 = arith.addf %36, %37 : vector<8x1024xf32>
      %39 = vector.extract_strided_slice %38 {offsets = [0, 0], sizes = [8, 512], strides = [1, 1]} : vector<8x1024xf32> to vector<8x512xf32>
      %40 = vector.extract_strided_slice %38 {offsets = [0, 512], sizes = [8, 512], strides = [1, 1]} : vector<8x1024xf32> to vector<8x512xf32>
      %41 = arith.addf %39, %40 : vector<8x512xf32>
      %42 = vector.extract_strided_slice %41 {offsets = [0, 0], sizes = [8, 256], strides = [1, 1]} : vector<8x512xf32> to vector<8x256xf32>
      %43 = vector.extract_strided_slice %41 {offsets = [0, 256], sizes = [8, 256], strides = [1, 1]} : vector<8x512xf32> to vector<8x256xf32>
      %44 = arith.addf %42, %43 : vector<8x256xf32>
      %45 = vector.extract_strided_slice %44 {offsets = [0, 0], sizes = [8, 128], strides = [1, 1]} : vector<8x256xf32> to vector<8x128xf32>
      %46 = vector.extract_strided_slice %44 {offsets = [0, 128], sizes = [8, 128], strides = [1, 1]} : vector<8x256xf32> to vector<8x128xf32>
      %47 = arith.addf %45, %46 : vector<8x128xf32>
      %48 = arith.addf %14, %47 : vector<8x128xf32>
      %c0_16 = arith.constant 0 : index
      %c0_17 = arith.constant 0 : index
      %49 = vector.load %arg3[%c0_16, %c0_17] : memref<8x128xf32, #tpu.memory_space<vmem>>, vector<8x128xf32>
      tpu.vector_store %arg3[%c0_16, %c0_17], %48 {strides = array<i32>} : memref<8x128xf32, #tpu.memory_space<vmem>>, vector<8x128xf32>,
    } else {
    }
    %c0_i32_3 = arith.constant 0 : i32
    %6 = arith.cmpi eq, %arg0, %c0_i32_3 : i32
    %7 = arith.extui %6 : i1 to i32
    %c0_i32_4 = arith.constant 0 : i32
    %8 = arith.cmpi ne, %7, %c0_i32_4 : i32
    scf.if %8 {
      %c0 = arith.constant 0 : index
      %c0_6 = arith.constant 0 : index
      %12 = vector.load %arg1[%c0, %c0_6] : memref<8x2048xf32, #tpu.memory_space<vmem>>, vector<8x2048xf32>
      %c2_i32 = arith.constant 2 : i32
      %13 = tpu.dynamic_rotate %12 by %c2_i32 dim 0 : vector<8x2048xf32>, i32 -> vector<8x2048xf32>
      %14 = arith.addf %12, %13 : vector<8x2048xf32>
      %c4_i32 = arith.constant 4 : i32
      %15 = tpu.dynamic_rotate %12 by %c4_i32 dim 0 : vector<8x2048xf32>, i32 -> vector<8x2048xf32>
      %16 = arith.addf %14, %15 : vector<8x2048xf32>
      %c6_i32 = arith.constant 6 : i32
      %17 = tpu.dynamic_rotate %12 by %c6_i32 dim 0 : vector<8x2048xf32>, i32 -> vector<8x2048xf32>
      %18 = arith.addf %16, %17 : vector<8x2048xf32>
      %cst = arith.constant 2.500000e-01 : f32
      %19 = vector.broadcast %cst : f32 to vector<8x2048xf32>
      %20 = arith.mulf %18, %19 : vector<8x2048xf32>
      %21 = arith.subf %12, %20 : vector<8x2048xf32>
      %22 = arith.mulf %21, %21 : vector<8x2048xf32>
      %c2_i32_7 = arith.constant 2 : i32
      %23 = tpu.dynamic_rotate %22 by %c2_i32_7 dim 0 : vector<8x2048xf32>, i32 -> vector<8x2048xf32>
      %24 = arith.addf %22, %23 : vector<8x2048xf32>
      %c4_i32_8 = arith.constant 4 : i32
      %25 = tpu.dynamic_rotate %22 by %c4_i32_8 dim 0 : vector<8x2048xf32>, i32 -> vector<8x2048xf32>
      %26 = arith.addf %24, %25 : vector<8x2048xf32>
      %c6_i32_9 = arith.constant 6 : i32
      %27 = tpu.dynamic_rotate %22 by %c6_i32_9 dim 0 : vector<8x2048xf32>, i32 -> vector<8x2048xf32>
      %28 = arith.addf %26, %27 : vector<8x2048xf32>
      %cst_10 = arith.constant 2.500000e-01 : f32
      %29 = vector.broadcast %cst_10 : f32 to vector<8x2048xf32>
      %30 = arith.mulf %28, %29 : vector<8x2048xf32>
      %cst_11 = arith.constant 9.99999993E-9 : f32
      %31 = vector.broadcast %cst_11 : f32 to vector<8x2048xf32>
      %32 = arith.addf %30, %31 : vector<8x2048xf32>
      %33 = math.sqrt %32 : vector<8x2048xf32>
      %34 = tpu.iota {dimensions = array<i32: 1>} : vector<8x2048xi32>
      %c0_i32_12 = arith.constant 0 : i32
      %35 = vector.broadcast %c0_i32_12 : i32 to vector<8x2048xi32>
      %36 = arith.addi %35, %34 : vector<8x2048xi32>
      %c1024_i32 = arith.constant 1024 : i32
      %37 = vector.broadcast %c1024_i32 : i32 to vector<8x2048xi32>
      %38 = arith.cmpi slt, %36, %37 : vector<8x2048xi32>
      %c0_13 = arith.constant 0 : index
      %c0_14 = arith.constant 0 : index
      %39 = vector.load %arg3[%c0_13, %c0_14] : memref<8x128xf32, #tpu.memory_space<vmem>>, vector<8x128xf32>
      %cst_15 = arith.constant 0.000000e+00 : f32
      %40 = vector.broadcast %cst_15 : f32 to vector<8x2048xf32>
      %41 = arith.select %38, %33, %40 : vector<8x2048xi1>, vector<8x2048xf32>
      %42 = vector.extract_strided_slice %41 {offsets = [0, 0], sizes = [8, 1024], strides = [1, 1]} : vector<8x2048xf32> to vector<8x1024xf32>
      %43 = vector.extract_strided_slice %41 {offsets = [0, 1024], sizes = [8, 1024], strides = [1, 1]} : vector<8x2048xf32> to vector<8x1024xf32>
      %44 = arith.addf %42, %43 : vector<8x1024xf32>
      %45 = vector.extract_strided_slice %44 {offsets = [0, 0], sizes = [8, 512], strides = [1, 1]} : vector<8x1024xf32> to vector<8x512xf32>
      %46 = vector.extract_strided_slice %44 {offsets = [0, 512], sizes = [8, 512], strides = [1, 1]} : vector<8x1024xf32> to vector<8x512xf32>
      %47 = arith.addf %45, %46 : vector<8x512xf32>
      %48 = vector.extract_strided_slice %47 {offsets = [0, 0], sizes = [8, 256], strides = [1, 1]} : vector<8x512xf32> to vector<8x256xf32>
      %49 = vector.extract_strided_slice %47 {offsets = [0, 256], sizes = [8, 256], strides = [1, 1]} : vector<8x512xf32> to vector<8x256xf32>
      %50 = arith.addf %48, %49 : vector<8x256xf32>
      %51 = vector.extract_strided_slice %50 {offsets = [0, 0], sizes = [8, 128], strides = [1, 1]} : vector<8x256xf32> to vector<8x128xf32>
      %52 = vector.extract_strided_slice %50 {offsets = [0, 128], sizes = [8, 128], strides = [1, 1]} : vector<8x256xf32> to vector<8x128xf32>
      %53 = arith.addf %51, %52 : vector<8x128xf32>
      %54 = arith.addf %39, %53 : vector<8x128xf32>
      %c0_16 = arith.constant 0 : index
      %c0_17 = arith.constant 0 : index
      %55 = vector.load %arg3[%c0_16, %c0_17] : memref<8x128xf32, #tpu.memory_space<vmem>>, vector<8x128xf32>
      tpu.vector_store %arg3[%c0_16, %c0_17], %54 {strides = array<i32>} : memref<8x128xf32, #tpu.memory_space<vmem>>, vector<8x128xf32>,
      %c0_18 = arith.constant 0 : index
      %c0_19 = arith.constant 0 : index
      %56 = vector.load %arg3[%c0_18, %c0_19] : memref<8x128xf32, #tpu.memory_space<vmem>>, vector<8x128xf32>
      %cst_20 = arith.constant dense<0.000000e+00> : vector<8xf32>
      %57 = vector.multi_reduction <add>, %56, %cst_20 [1] : vector<8x128xf32> to vector<8xf32>
      %58 = vector.shape_cast %57 : vector<8xf32> to vector<8x1xf32>
      %cst_21 = arith.constant 9.765625E-4 : f32
      %59 = vector.broadcast %cst_21 : f32 to vector<8x1xf32>
      %60 = arith.mulf %58, %59 : vector<8x1xf32>
      %61 = vector.shape_cast %60 : vector<8x1xf32> to vector<8x1xf32>
      %62 = vector.broadcast %61 : vector<8x1xf32> to vector<8x2048xf32>
      %63 = arith.select %38, %12, %62 : vector<8x2048xi1>, vector<8x2048xf32>
      %c0_22 = arith.constant 0 : index
      %c0_23 = arith.constant 0 : index
      %64 = vector.load %arg2[%c0_22, %c0_23] : memref<8x2048xf32, #tpu.memory_space<vmem>>, vector<8x2048xf32>
      tpu.vector_store %arg2[%c0_22, %c0_23], %63 {strides = array<i32>} : memref<8x2048xf32, #tpu.memory_space<vmem>>, vector<8x2048xf32>,
    } else {
    }
    %c1_i32 = arith.constant 1 : i32
    %9 = arith.cmpi sge, %arg0, %c1_i32 : i32
    %10 = arith.extui %9 : i1 to i32
    %c0_i32_5 = arith.constant 0 : i32
    %11 = arith.cmpi ne, %10, %c0_i32_5 : i32
    scf.if %11 {
      %c0 = arith.constant 0 : index
      %c0_6 = arith.constant 0 : index
      %12 = vector.load %arg3[%c0, %c0_6] : memref<8x128xf32, #tpu.memory_space<vmem>>, vector<8x128xf32>
      %cst = arith.constant dense<0.000000e+00> : vector<8xf32>
      %13 = vector.multi_reduction <add>, %12, %cst [1] : vector<8x128xf32> to vector<8xf32>
      %14 = vector.shape_cast %13 : vector<8xf32> to vector<8x1xf32>
      %cst_7 = arith.constant 9.765625E-4 : f32
      %15 = vector.broadcast %cst_7 : f32 to vector<8x1xf32>
      %16 = arith.mulf %14, %15 : vector<8x1xf32>
      %17 = vector.shape_cast %16 : vector<8x1xf32> to vector<8x1xf32>
      %18 = vector.broadcast %17 : vector<8x1xf32> to vector<8x2048xf32>
      %c0_8 = arith.constant 0 : index
      %c0_9 = arith.constant 0 : index
      %19 = vector.load %arg2[%c0_8, %c0_9] : memref<8x2048xf32, #tpu.memory_space<vmem>>, vector<8x2048xf32>
      tpu.vector_store %arg2[%c0_8, %c0_9], %18 {strides = array<i32>} : memref<8x2048xf32, #tpu.memory_space<vmem>>, vector<8x2048xf32>,
    } else {
    }
    return
  }
  func.func @transform_0(%arg0: i32) -> (i32, i32) {
    %c0_i32 = arith.constant 0 : i32
    %0 = arith.minsi %arg0, %c0_i32 : i32
    %c0_i32_0 = arith.constant 0 : i32
    %c0_i32_1 = arith.constant 0 : i32
    return %c0_i32_0, %0 : i32, i32
  }
  func.func @transform_1(%arg0: i32) -> (i32, i32) {
    %c0_i32 = arith.constant 0 : i32
    %c0_i32_0 = arith.constant 0 : i32
    return %c0_i32, %arg0 : i32, i32
  }
}

</mosaic_0001>

<llo_original>
// kernel: tpu_custom_call.1
$region0: #{tpu_custom_call.1}
  #allocation0 [shape = 'u32[]', space=smem, size = 0x4, offset = 0x4, fixed_abs, tag = 'smem constant byte address 0x4 - core index']
  #allocation1 [shape = 'u32[144,128]{1,0:T(1,128)}', space=vmem, size = 0x12000, scoped, tag = 'internal scratch']
  #allocation2 [shape = 'f32[8,128]{1,0:T(8,128)}', space=vmem, size = 0x1000, scoped, tag = 'scratch operand']
  %s0 = inlined_call_operand.hbm [shape: f32[8,1024], index: 0, kind: input, shape index: {}]
  %s1 = inlined_call_operand.hbm [shape: f32[8,1280], index: 1, kind: output, shape index: {}]
  %s2 = sld [smem:[#allocation0]]
  $region34: #{tpu_custom_call.1} parent=0
    _
  %s4 = ssub.s32 1, %s2
  %s5 = scalar_select 0, %s4, %s2
  $region1: #{tpu_custom_call.1} parent=0
    #allocation3 [shape = 'u8[65536]{0}', space=vmem, size = 0x10000, scoped, tag = 'input window, operand 0, single buffered']
    #allocation4 [shape = 's32[1]{0}', space=sflag, size = 0x4, scoped, tag = 'scoped memory for tpu_custom_call.1']
    #allocation5 [shape = 's32[1]{0}', space=sflag, size = 0x4, scoped, tag = 'scoped memory for tpu_custom_call.1']
    #allocation6 [shape = 'u8[65536]{0}', space=vmem, size = 0x10000, scoped, tag = 'output window, operand 0, single buffered']
    %6 = vsyncpa [#allocation4], 0
    %7 = vsyncpa [#allocation5], 0
    // Predicated region
    $region2: #{tpu_custom_call.1} parent=1 // pred_check
      _
    $region3: #{tpu_custom_call.1} parent=1 // pred_check_branch
      %9 = sbr.rel (0) target = $region5
    $region4: #{tpu_custom_call.1} parent=1 // pred_region
      %s11 = ssub.s32 2048, 1024
      %12 = vsyncadd [#allocation4], %s11
      %s14 = sshll.u32 [#allocation3], 4
      %s15 = int_to_ptr.vmem [resolvable:$true] %s14
      %17 = dma.hbm_to_vmem [thread:$0]  %s0, 1024, %s15, [#allocation4]
    $region5: #{tpu_custom_call.1} parent=1 // pred_fallthru
      _
    // Predicated region
    $region6: #{tpu_custom_call.1} parent=1 // pred_check
      _
    $region7: #{tpu_custom_call.1} parent=1 // pred_check_branch
      %19 = sbr.rel (0) target = $region9
    $region8: #{tpu_custom_call.1} parent=1 // pred_region
      %20 = dma.done [#allocation4], 2048
    $region9: #{tpu_custom_call.1} parent=1 // pred_fallthru
      _
    %p21 = scmp.eq.s32.totalorder 0, 0
    // Predicated region
    $region10: #{tpu_custom_call.1} parent=1 // pred_check
      %p22 = pneg %p21
    $region11: #{tpu_custom_call.1} parent=1 // pred_check_branch
      %24 = sbr.rel (%p22) target = $region13
    $region12: #{tpu_custom_call.1} parent=1 // pred_region
      %25 = vst [vmem:[#allocation2] sm:$0xff] 0.0
    $region13: #{tpu_custom_call.1} parent=1 // pred_fallthru
      _
    %p26 = scmp.lt.s32.totalorder 0, 0
    // Predicated region
    $region14: #{tpu_custom_call.1} parent=1 // pred_check
      %p27 = pneg %p26
    $region15: #{tpu_custom_call.1} parent=1 // pred_check_branch
      %29 = sbr.rel (%p27) target = $region17
    $region16: #{tpu_custom_call.1} parent=1 // pred_region
      %v30 = vld [vmem:[#allocation3] sm:$0xff]
      %v31 = vld [vmem:[#allocation3 + $0x8] sm:$0xff]
      %v32 = vld [vmem:[#allocation3 + $0x10] sm:$0xff]
      %v33 = vld [vmem:[#allocation3 + $0x18] sm:$0xff]
      %v34 = vld [vmem:[#allocation3 + $0x20] sm:$0xff]
      %v35 = vld [vmem:[#allocation3 + $0x28] sm:$0xff]
      %v36 = vld [vmem:[#allocation3 + $0x30] sm:$0xff]
      %v37 = vld [vmem:[#allocation3 + $0x38] sm:$0xff]
      %v38 = vld [vmem:[#allocation3 + $0x40] sm:$0xff]
      %v39 = vld [vmem:[#allocation3 + $0x48] sm:$0xff]
      %v40 = vld [vmem:[#allocation3 + $0x50] sm:$0xff]
      %v41 = vld [vmem:[#allocation3 + $0x58] sm:$0xff]
      %v42 = vld [vmem:[#allocation3 + $0x60] sm:$0xff]
      %v43 = vld [vmem:[#allocation3 + $0x68] sm:$0xff]
      %v44 = vld [vmem:[#allocation3 + $0x70] sm:$0xff]
      %v45 = vld [vmem:[#allocation3 + $0x78] sm:$0xff]
      %46 = vst [vmem:[#allocation6] sm:$0xff] %v30
      %47 = vst [vmem:[#allocation6 + $0x8] sm:$0xff] %v31
      %48 = vst [vmem:[#allocation6 + $0x10] sm:$0xff] %v32
      %49 = vst [vmem:[#allocation6 + $0x18] sm:$0xff] %v33
      %50 = vst [vmem:[#allocation6 + $0x20] sm:$0xff] %v34
      %51 = vst [vmem:[#allocation6 + $0x28] sm:$0xff] %v35
      %52 = vst [vmem:[#allocation6 + $0x30] sm:$0xff] %v36
      %53 = vst [vmem:[#allocation6 + $0x38] sm:$0xff] %v37
      %54 = vst [vmem:[#allocation6 + $0x40] sm:$0xff] %v38
      %55 = vst [vmem:[#allocation6 + $0x48] sm:$0xff] %v39
      %56 = vst [vmem:[#allocation6 + $0x50] sm:$0xff] %v40
      %57 = vst [vmem:[#allocation6 + $0x58] sm:$0xff] %v41
      %58 = vst [vmem:[#allocation6 + $0x60] sm:$0xff] %v42
      %59 = vst [vmem:[#allocation6 + $0x68] sm:$0xff] %v43
      %60 = vst [vmem:[#allocation6 + $0x70] sm:$0xff] %v44
      %61 = vst [vmem:[#allocation6 + $0x78] sm:$0xff] %v45
      %v62 = vld [vmem:[#allocation2] sm:$0xff]
      %v63 = vrot.slane %v30, 6
      %v64 = vrot.slane %v31, 6
      %v65 = vrot.slane %v32, 6
      %v66 = vrot.slane %v33, 6
      %v67 = vrot.slane %v34, 6
      %v68 = vrot.slane %v35, 6
      %v69 = vrot.slane %v36, 6
      %v70 = vrot.slane %v37, 6
      %v71 = vrot.slane %v38, 6
      %v72 = vrot.slane %v39, 6
      %v73 = vrot.slane %v40, 6
      %v74 = vrot.slane %v41, 6
      %v75 = vrot.slane %v42, 6
      %v76 = vrot.slane %v43, 6
      %v77 = vrot.slane %v44, 6
      %v78 = vrot.slane %v45, 6
      %v79 = vadd.f32 %v30, %v63
      %v80 = vadd.f32 %v31, %v64
      %v81 = vadd.f32 %v32, %v65
      %v82 = vadd.f32 %v33, %v66
      %v83 = vadd.f32 %v34, %v67
      %v84 = vadd.f32 %v35, %v68
      %v85 = vadd.f32 %v36, %v69
      %v86 = vadd.f32 %v37, %v70
      %v87 = vadd.f32 %v38, %v71
      %v88 = vadd.f32 %v39, %v72
      %v89 = vadd.f32 %v40, %v73
      %v90 = vadd.f32 %v41, %v74
      %v91 = vadd.f32 %v42, %v75
      %v92 = vadd.f32 %v43, %v76
      %v93 = vadd.f32 %v44, %v77
      %v94 = vadd.f32 %v45, %v78
      %v95 = vrot.slane %v30, 4
      %v96 = vrot.slane %v31, 4
      %v97 = vrot.slane %v32, 4
      %v98 = vrot.slane %v33, 4
      %v99 = vrot.slane %v34, 4
      %v100 = vrot.slane %v35, 4
      %v101 = vrot.slane %v36, 4
      %v102 = vrot.slane %v37, 4
      %v103 = vrot.slane %v38, 4
      %v104 = vrot.slane %v39, 4
      %v105 = vrot.slane %v40, 4
      %v106 = vrot.slane %v41, 4
      %v107 = vrot.slane %v42, 4
      %v108 = vrot.slane %v43, 4
      %v109 = vrot.slane %v44, 4
      %v110 = vrot.slane %v45, 4
      %v111 = vadd.f32 %v79, %v95
      %v112 = vadd.f32 %v80, %v96
      %v113 = vadd.f32 %v81, %v97
      %v114 = vadd.f32 %v82, %v98
      %v115 = vadd.f32 %v83, %v99
      %v116 = vadd.f32 %v84, %v100
      %v117 = vadd.f32 %v85, %v101
      %v118 = vadd.f32 %v86, %v102
      %v119 = vadd.f32 %v87, %v103
      %v120 = vadd.f32 %v88, %v104
      %v121 = vadd.f32 %v89, %v105
      %v122 = vadd.f32 %v90, %v106
      %v123 = vadd.f32 %v91, %v107
      %v124 = vadd.f32 %v92, %v108
      %v125 = vadd.f32 %v93, %v109
      %v126 = vadd.f32 %v94, %v110
      %v127 = vrot.slane %v30, 2
      %v128 = vrot.slane %v31, 2
      %v129 = vrot.slane %v32, 2
      %v130 = vrot.slane %v33, 2
      %v131 = vrot.slane %v34, 2
      %v132 = vrot.slane %v35, 2
      %v133 = vrot.slane %v36, 2
      %v134 = vrot.slane %v37, 2
      %v135 = vrot.slane %v38, 2
      %v136 = vrot.slane %v39, 2
      %v137 = vrot.slane %v40, 2
      %v138 = vrot.slane %v41, 2
      %v139 = vrot.slane %v42, 2
      %v140 = vrot.slane %v43, 2
      %v141 = vrot.slane %v44, 2
      %v142 = vrot.slane %v45, 2
      %v143 = vadd.f32 %v111, %v127
      %v144 = vadd.f32 %v112, %v128
      %v145 = vadd.f32 %v113, %v129
      %v146 = vadd.f32 %v114, %v130
      %v147 = vadd.f32 %v115, %v131
      %v148 = vadd.f32 %v116, %v132
      %v149 = vadd.f32 %v117, %v133
      %v150 = vadd.f32 %v118, %v134
      %v151 = vadd.f32 %v119, %v135
      %v152 = vadd.f32 %v120, %v136
      %v153 = vadd.f32 %v121, %v137
      %v154 = vadd.f32 %v122, %v138
      %v155 = vadd.f32 %v123, %v139
      %v156 = vadd.f32 %v124, %v140
      %v157 = vadd.f32 %v125, %v141
      %v158 = vadd.f32 %v126, %v142
      %v159 = vmul.f32 %v143, 0.25
      %v160 = vmul.f32 %v144, 0.25
      %v161 = vmul.f32 %v145, 0.25
      %v162 = vmul.f32 %v146, 0.25
      %v163 = vmul.f32 %v147, 0.25
      %v164 = vmul.f32 %v148, 0.25
      %v165 = vmul.f32 %v149, 0.25
      %v166 = vmul.f32 %v150, 0.25
      %v167 = vmul.f32 %v151, 0.25
      %v168 = vmul.f32 %v152, 0.25
      %v169 = vmul.f32 %v153, 0.25
      %v170 = vmul.f32 %v154, 0.25
      %v171 = vmul.f32 %v155, 0.25
      %v172 = vmul.f32 %v156, 0.25
      %v173 = vmul.f32 %v157, 0.25
      %v174 = vmul.f32 %v158, 0.25
      %v175 = vsub.f32 %v30, %v159
      %v176 = vsub.f32 %v31, %v160
      %v177 = vsub.f32 %v32, %v161
      %v178 = vsub.f32 %v33, %v162
      %v179 = vsub.f32 %v34, %v163
      %v180 = vsub.f32 %v35, %v164
      %v181 = vsub.f32 %v36, %v165
      %v182 = vsub.f32 %v37, %v166
      %v183 = vsub.f32 %v38, %v167
      %v184 = vsub.f32 %v39, %v168
      %v185 = vsub.f32 %v40, %v169
      %v186 = vsub.f32 %v41, %v170
      %v187 = vsub.f32 %v42, %v171
      %v188 = vsub.f32 %v43, %v172
      %v189 = vsub.f32 %v44, %v173
      %v190 = vsub.f32 %v45, %v174
      %v191 = vmul.f32 %v175, %v175
      %v192 = vmul.f32 %v176, %v176
      %v193 = vmul.f32 %v177, %v177
      %v194 = vmul.f32 %v178, %v178
      %v195 = vmul.f32 %v179, %v179
      %v196 = vmul.f32 %v180, %v180
      %v197 = vmul.f32 %v181, %v181
      %v198 = vmul.f32 %v182, %v182
      %v199 = vmul.f32 %v183, %v183
      %v200 = vmul.f32 %v184, %v184
      %v201 = vmul.f32 %v185, %v185
      %v202 = vmul.f32 %v186, %v186
      %v203 = vmul.f32 %v187, %v187
      %v204 = vmul.f32 %v188, %v188
      %v205 = vmul.f32 %v189, %v189
      %v206 = vmul.f32 %v190, %v190
      %v207 = vrot.slane %v191, 6
      %v208 = vrot.slane %v192, 6
      %v209 = vrot.slane %v193, 6
      %v210 = vrot.slane %v194, 6
      %v211 = vrot.slane %v195, 6
      %v212 = vrot.slane %v196, 6
      %v213 = vrot.slane %v197, 6
      %v214 = vrot.slane %v198, 6
      %v215 = vrot.slane %v199, 6
      %v216 = vrot.slane %v200, 6
      %v217 = vrot.slane %v201, 6
      %v218 = vrot.slane %v202, 6
      %v219 = vrot.slane %v203, 6
      %v220 = vrot.slane %v204, 6
      %v221 = vrot.slane %v205, 6
      %v222 = vrot.slane %v206, 6
      %v223 = vadd.f32 %v191, %v207
      %v224 = vadd.f32 %v192, %v208
      %v225 = vadd.f32 %v193, %v209
      %v226 = vadd.f32 %v194, %v210
      %v227 = vadd.f32 %v195, %v211
      %v228 = vadd.f32 %v196, %v212
      %v229 = vadd.f32 %v197, %v213
      %v230 = vadd.f32 %v198, %v214
      %v231 = vadd.f32 %v199, %v215
      %v232 = vadd.f32 %v200, %v216
      %v233 = vadd.f32 %v201, %v217
      %v234 = vadd.f32 %v202, %v218
      %v235 = vadd.f32 %v203, %v219
      %v236 = vadd.f32 %v204, %v220
      %v237 = vadd.f32 %v205, %v221
      %v238 = vadd.f32 %v206, %v222
      %v239 = vrot.slane %v191, 4
      %v240 = vrot.slane %v192, 4
      %v241 = vrot.slane %v193, 4
      %v242 = vrot.slane %v194, 4
      %v243 = vrot.slane %v195, 4
      %v244 = vrot.slane %v196, 4
      %v245 = vrot.slane %v197, 4
      %v246 = vrot.slane %v198, 4
      %v247 = vrot.slane %v199, 4
      %v248 = vrot.slane %v200, 4
      %v249 = vrot.slane %v201, 4
      %v250 = vrot.slane %v202, 4
      %v251 = vrot.slane %v203, 4
      %v252 = vrot.slane %v204, 4
      %v253 = vrot.slane %v205, 4
      %v254 = vrot.slane %v206, 4
      %v255 = vadd.f32 %v223, %v239
      %v256 = vadd.f32 %v224, %v240
      %v257 = vadd.f32 %v225, %v241
      %v258 = vadd.f32 %v226, %v242
      %v259 = vadd.f32 %v227, %v243
      %v260 = vadd.f32 %v228, %v244
      %v261 = vadd.f32 %v229, %v245
      %v262 = vadd.f32 %v230, %v246
      %v263 = vadd.f32 %v231, %v247
      %v264 = vadd.f32 %v232, %v248
      %v265 = vadd.f32 %v233, %v249
      %v266 = vadd.f32 %v234, %v250
      %v267 = vadd.f32 %v235, %v251
      %v268 = vadd.f32 %v236, %v252
      %v269 = vadd.f32 %v237, %v253
      %v270 = vadd.f32 %v238, %v254
      %v271 = vrot.slane %v191, 2
      %v272 = vrot.slane %v192, 2
      %v273 = vrot.slane %v193, 2
      %v274 = vrot.slane %v194, 2
      %v275 = vrot.slane %v195, 2
      %v276 = vrot.slane %v196, 2
      %v277 = vrot.slane %v197, 2
      %v278 = vrot.slane %v198, 2
      %v279 = vrot.slane %v199, 2
      %v280 = vrot.slane %v200, 2
      %v281 = vrot.slane %v201, 2
      %v282 = vrot.slane %v202, 2
      %v283 = vrot.slane %v203, 2
      %v284 = vrot.slane %v204, 2
      %v285 = vrot.slane %v205, 2
      %v286 = vrot.slane %v206, 2
      %v287 = vadd.f32 %v255, %v271
      %v288 = vadd.f32 %v256, %v272
      %v289 = vadd.f32 %v257, %v273
      %v290 = vadd.f32 %v258, %v274
      %v291 = vadd.f32 %v259, %v275
      %v292 = vadd.f32 %v260, %v276
      %v293 = vadd.f32 %v261, %v277
      %v294 = vadd.f32 %v262, %v278
      %v295 = vadd.f32 %v263, %v279
      %v296 = vadd.f32 %v264, %v280
      %v297 = vadd.f32 %v265, %v281
      %v298 = vadd.f32 %v266, %v282
      %v299 = vadd.f32 %v267, %v283
      %v300 = vadd.f32 %v268, %v284
      %v301 = vadd.f32 %v269, %v285
      %v302 = vadd.f32 %v270, %v286
      %v303 = vmul.f32 %v287, 0.25
      %v304 = vmul.f32 %v288, 0.25
      %v305 = vmul.f32 %v289, 0.25
      %v306 = vmul.f32 %v290, 0.25
      %v307 = vmul.f32 %v291, 0.25
      %v308 = vmul.f32 %v292, 0.25
      %v309 = vmul.f32 %v293, 0.25
      %v310 = vmul.f32 %v294, 0.25
      %v311 = vmul.f32 %v295, 0.25
      %v312 = vmul.f32 %v296, 0.25
      %v313 = vmul.f32 %v297, 0.25
      %v314 = vmul.f32 %v298, 0.25
      %v315 = vmul.f32 %v299, 0.25
      %v316 = vmul.f32 %v300, 0.25
      %v317 = vmul.f32 %v301, 0.25
      %v318 = vmul.f32 %v302, 0.25
      %v319 = vadd.f32 %v303, 1e-08
      %v320 = vadd.f32 %v304, 1e-08
      %v321 = vadd.f32 %v305, 1e-08
      %v322 = vadd.f32 %v306, 1e-08
      %v323 = vadd.f32 %v307, 1e-08
      %v324 = vadd.f32 %v308, 1e-08
      %v325 = vadd.f32 %v309, 1e-08
      %v326 = vadd.f32 %v310, 1e-08
      %v327 = vadd.f32 %v311, 1e-08
      %v328 = vadd.f32 %v312, 1e-08
      %v329 = vadd.f32 %v313, 1e-08
      %v330 = vadd.f32 %v314, 1e-08
      %v331 = vadd.f32 %v315, 1e-08
      %v332 = vadd.f32 %v316, 1e-08
      %v333 = vadd.f32 %v317, 1e-08
      %v334 = vadd.f32 %v318, 1e-08
      %v335 = vrsqrt.pop %v319
      %v336 = vmul.f32 %v319, %v335
      %vm337 = vcmp.eq.f32.partialorder %v319, inf
      %v338 = vsel %vm337, %v319, %v336
      %vm339 = vcmp.eq.f32.partialorder %v319, 0.0
      %v340 = vand.u32 %v319, 2147483648
      %v341 = vsel %vm339, %v340, %v338
      %v342 = vrsqrt.pop %v320
      %v343 = vmul.f32 %v320, %v342
      %vm344 = vcmp.eq.f32.partialorder %v320, inf
      %v345 = vsel %vm344, %v320, %v343
      %vm346 = vcmp.eq.f32.partialorder %v320, 0.0
      %v347 = vand.u32 %v320, 2147483648
      %v348 = vsel %vm346, %v347, %v345
      %v349 = vrsqrt.pop %v321
      %v350 = vmul.f32 %v321, %v349
      %vm351 = vcmp.eq.f32.partialorder %v321, inf
      %v352 = vsel %vm351, %v321, %v350
      %vm353 = vcmp.eq.f32.partialorder %v321, 0.0
      %v354 = vand.u32 %v321, 2147483648
      %v355 = vsel %vm353, %v354, %v352
      %v356 = vrsqrt.pop %v322
      %v357 = vmul.f32 %v322, %v356
      %vm358 = vcmp.eq.f32.partialorder %v322, inf
      %v359 = vsel %vm358, %v322, %v357
      %vm360 = vcmp.eq.f32.partialorder %v322, 0.0
      %v361 = vand.u32 %v322, 2147483648
      %v362 = vsel %vm360, %v361, %v359
      %v363 = vrsqrt.pop %v323
      %v364 = vmul.f32 %v323, %v363
      %vm365 = vcmp.eq.f32.partialorder %v323, inf
      %v366 = vsel %vm365, %v323, %v364
      %vm367 = vcmp.eq.f32.partialorder %v323, 0.0
      %v368 = vand.u32 %v323, 2147483648
      %v369 = vsel %vm367, %v368, %v366
      %v370 = vrsqrt.pop %v324
      %v371 = vmul.f32 %v324, %v370
      %vm372 = vcmp.eq.f32.partialorder %v324, inf
      %v373 = vsel %vm372, %v324, %v371
      %vm374 = vcmp.eq.f32.partialorder %v324, 0.0
      %v375 = vand.u32 %v324, 2147483648
      %v376 = vsel %vm374, %v375, %v373
      %v377 = vrsqrt.pop %v325
      %v378 = vmul.f32 %v325, %v377
      %vm379 = vcmp.eq.f32.partialorder %v325, inf
      %v380 = vsel %vm379, %v325, %v378
      %vm381 = vcmp.eq.f32.partialorder %v325, 0.0
      %v382 = vand.u32 %v325, 2147483648
      %v383 = vsel %vm381, %v382, %v380
      %v384 = vrsqrt.pop %v326
      %v385 = vmul.f32 %v326, %v384
      %vm386 = vcmp.eq.f32.partialorder %v326, inf
      %v387 = vsel %vm386, %v326, %v385
      %vm388 = vcmp.eq.f32.partialorder %v326, 0.0
      %v389 = vand.u32 %v326, 2147483648
      %v390 = vsel %vm388, %v389, %v387
      %v391 = vrsqrt.pop %v327
      %v392 = vmul.f32 %v327, %v391
      %vm393 = vcmp.eq.f32.partialorder %v327, inf
      %v394 = vsel %vm393, %v327, %v392
      %vm395 = vcmp.eq.f32.partialorder %v327, 0.0
      %v396 = vand.u32 %v327, 2147483648
      %v397 = vsel %vm395, %v396, %v394
      %v398 = vrsqrt.pop %v328
      %v399 = vmul.f32 %v328, %v398
      %vm400 = vcmp.eq.f32.partialorder %v328, inf
      %v401 = vsel %vm400, %v328, %v399
      %vm402 = vcmp.eq.f32.partialorder %v328, 0.0
      %v403 = vand.u32 %v328, 2147483648
      %v404 = vsel %vm402, %v403, %v401
      %v405 = vrsqrt.pop %v329
      %v406 = vmul.f32 %v329, %v405
      %vm407 = vcmp.eq.f32.partialorder %v329, inf
      %v408 = vsel %vm407, %v329, %v406
      %vm409 = vcmp.eq.f32.partialorder %v329, 0.0
      %v410 = vand.u32 %v329, 2147483648
      %v411 = vsel %vm409, %v410, %v408
      %v412 = vrsqrt.pop %v330
      %v413 = vmul.f32 %v330, %v412
      %vm414 = vcmp.eq.f32.partialorder %v330, inf
      %v415 = vsel %vm414, %v330, %v413
      %vm416 = vcmp.eq.f32.partialorder %v330, 0.0
      %v417 = vand.u32 %v330, 2147483648
      %v418 = vsel %vm416, %v417, %v415
      %v419 = vrsqrt.pop %v331
      %v420 = vmul.f32 %v331, %v419
      %vm421 = vcmp.eq.f32.partialorder %v331, inf
      %v422 = vsel %vm421, %v331, %v420
      %vm423 = vcmp.eq.f32.partialorder %v331, 0.0
      %v424 = vand.u32 %v331, 2147483648
      %v425 = vsel %vm423, %v424, %v422
      %v426 = vrsqrt.pop %v332
      %v427 = vmul.f32 %v332, %v426
      %vm428 = vcmp.eq.f32.partialorder %v332, inf
      %v429 = vsel %vm428, %v332, %v427
      %vm430 = vcmp.eq.f32.partialorder %v332, 0.0
      %v431 = vand.u32 %v332, 2147483648
      %v432 = vsel %vm430, %v431, %v429
      %v433 = vrsqrt.pop %v333
      %v434 = vmul.f32 %v333, %v433
      %vm435 = vcmp.eq.f32.partialorder %v333, inf
      %v436 = vsel %vm435, %v333, %v434
      %vm437 = vcmp.eq.f32.partialorder %v333, 0.0
      %v438 = vand.u32 %v333, 2147483648
      %v439 = vsel %vm437, %v438, %v436
      %v440 = vrsqrt.pop %v334
      %v441 = vmul.f32 %v334, %v440
      %vm442 = vcmp.eq.f32.partialorder %v334, inf
      %v443 = vsel %vm442, %v334, %v441
      %vm444 = vcmp.eq.f32.partialorder %v334, 0.0
      %v445 = vand.u32 %v334, 2147483648
      %v446 = vsel %vm444, %v445, %v443
      %v447 = vadd.f32 %v341, %v397
      %v448 = vadd.f32 %v348, %v404
      %v449 = vadd.f32 %v355, %v411
      %v450 = vadd.f32 %v362, %v418
      %v451 = vadd.f32 %v369, %v425
      %v452 = vadd.f32 %v376, %v432
      %v453 = vadd.f32 %v383, %v439
      %v454 = vadd.f32 %v390, %v446
      %v455 = vadd.f32 %v447, %v451
      %v456 = vadd.f32 %v448, %v452
      %v457 = vadd.f32 %v449, %v453
      %v458 = vadd.f32 %v450, %v454
      %v459 = vadd.f32 %v455, %v457
      %v460 = vadd.f32 %v456, %v458
      %v461 = vadd.f32 %v459, %v460
      %v462 = vadd.f32 %v62, %v461
      %463 = vst [vmem:[#allocation2] sm:$0xff] %v462
    $region17: #{tpu_custom_call.1} parent=1 // pred_fallthru
      _
    // Predicated region
    $region18: #{tpu_custom_call.1} parent=1 // pred_check
      %p464 = pneg %p21
    $region19: #{tpu_custom_call.1} parent=1 // pred_check_branch
      %466 = sbr.rel (%p464) target = $region21
    $region20: #{tpu_custom_call.1} parent=1 // pred_region
      %v467 = vld [vmem:[#allocation3] sm:$0xff]
      %v468 = vld [vmem:[#allocation3 + $0x8] sm:$0xff]
      %v469 = vld [vmem:[#allocation3 + $0x10] sm:$0xff]
      %v470 = vld [vmem:[#allocation3 + $0x18] sm:$0xff]
      %v471 = vld [vmem:[#allocation3 + $0x20] sm:$0xff]
      %v472 = vld [vmem:[#allocation3 + $0x28] sm:$0xff]
      %v473 = vld [vmem:[#allocation3 + $0x30] sm:$0xff]
      %v474 = vld [vmem:[#allocation3 + $0x38] sm:$0xff]
      %v475 = vld [vmem:[#allocation3 + $0x40] sm:$0xff]
      %v476 = vld [vmem:[#allocation3 + $0x48] sm:$0xff]
      %v477 = vld [vmem:[#allocation3 + $0x50] sm:$0xff]
      %v478 = vld [vmem:[#allocation3 + $0x58] sm:$0xff]
      %v479 = vld [vmem:[#allocation3 + $0x60] sm:$0xff]
      %v480 = vld [vmem:[#allocation3 + $0x68] sm:$0xff]
      %v481 = vld [vmem:[#allocation3 + $0x70] sm:$0xff]
      %v482 = vld [vmem:[#allocation3 + $0x78] sm:$0xff]
      %v483 = vrot.slane %v467, 6
      %v484 = vrot.slane %v468, 6
      %v485 = vrot.slane %v469, 6
      %v486 = vrot.slane %v470, 6
      %v487 = vrot.slane %v471, 6
      %v488 = vrot.slane %v472, 6
      %v489 = vrot.slane %v473, 6
      %v490 = vrot.slane %v474, 6
      %v491 = vrot.slane %v475, 6
      %v492 = vrot.slane %v476, 6
      %v493 = vrot.slane %v477, 6
      %v494 = vrot.slane %v478, 6
      %v495 = vrot.slane %v479, 6
      %v496 = vrot.slane %v480, 6
      %v497 = vrot.slane %v481, 6
      %v498 = vrot.slane %v482, 6
      %v499 = vadd.f32 %v467, %v483
      %v500 = vadd.f32 %v468, %v484
      %v501 = vadd.f32 %v469, %v485
      %v502 = vadd.f32 %v470, %v486
      %v503 = vadd.f32 %v471, %v487
      %v504 = vadd.f32 %v472, %v488
      %v505 = vadd.f32 %v473, %v489
      %v506 = vadd.f32 %v474, %v490
      %v507 = vadd.f32 %v475, %v491
      %v508 = vadd.f32 %v476, %v492
      %v509 = vadd.f32 %v477, %v493
      %v510 = vadd.f32 %v478, %v494
      %v511 = vadd.f32 %v479, %v495
      %v512 = vadd.f32 %v480, %v496
      %v513 = vadd.f32 %v481, %v497
      %v514 = vadd.f32 %v482, %v498
      %v515 = vrot.slane %v467, 4
      %v516 = vrot.slane %v468, 4
      %v517 = vrot.slane %v469, 4
      %v518 = vrot.slane %v470, 4
      %v519 = vrot.slane %v471, 4
      %v520 = vrot.slane %v472, 4
      %v521 = vrot.slane %v473, 4
      %v522 = vrot.slane %v474, 4
      %v523 = vrot.slane %v475, 4
      %v524 = vrot.slane %v476, 4
      %v525 = vrot.slane %v477, 4
      %v526 = vrot.slane %v478, 4
      %v527 = vrot.slane %v479, 4
      %v528 = vrot.slane %v480, 4
      %v529 = vrot.slane %v481, 4
      %v530 = vrot.slane %v482, 4
      %v531 = vadd.f32 %v499, %v515
      %v532 = vadd.f32 %v500, %v516
      %v533 = vadd.f32 %v501, %v517
      %v534 = vadd.f32 %v502, %v518
      %v535 = vadd.f32 %v503, %v519
      %v536 = vadd.f32 %v504, %v520
      %v537 = vadd.f32 %v505, %v521
      %v538 = vadd.f32 %v506, %v522
      %v539 = vadd.f32 %v507, %v523
      %v540 = vadd.f32 %v508, %v524
      %v541 = vadd.f32 %v509, %v525
      %v542 = vadd.f32 %v510, %v526
      %v543 = vadd.f32 %v511, %v527
      %v544 = vadd.f32 %v512, %v528
      %v545 = vadd.f32 %v513, %v529
      %v546 = vadd.f32 %v514, %v530
      %v547 = vrot.slane %v467, 2
      %v548 = vrot.slane %v468, 2
      %v549 = vrot.slane %v469, 2
      %v550 = vrot.slane %v470, 2
      %v551 = vrot.slane %v471, 2
      %v552 = vrot.slane %v472, 2
      %v553 = vrot.slane %v473, 2
      %v554 = vrot.slane %v474, 2
      %v555 = vrot.slane %v475, 2
      %v556 = vrot.slane %v476, 2
      %v557 = vrot.slane %v477, 2
      %v558 = vrot.slane %v478, 2
      %v559 = vrot.slane %v479, 2
      %v560 = vrot.slane %v480, 2
      %v561 = vrot.slane %v481, 2
      %v562 = vrot.slane %v482, 2
      %v563 = vadd.f32 %v531, %v547
      %v564 = vadd.f32 %v532, %v548
      %v565 = vadd.f32 %v533, %v549
      %v566 = vadd.f32 %v534, %v550
      %v567 = vadd.f32 %v535, %v551
      %v568 = vadd.f32 %v536, %v552
      %v569 = vadd.f32 %v537, %v553
      %v570 = vadd.f32 %v538, %v554
      %v571 = vadd.f32 %v539, %v555
      %v572 = vadd.f32 %v540, %v556
      %v573 = vadd.f32 %v541, %v557
      %v574 = vadd.f32 %v542, %v558
      %v575 = vadd.f32 %v543, %v559
      %v576 = vadd.f32 %v544, %v560
      %v577 = vadd.f32 %v545, %v561
      %v578 = vadd.f32 %v546, %v562
      %v579 = vmul.f32 %v563, 0.25
      %v580 = vmul.f32 %v564, 0.25
      %v581 = vmul.f32 %v565, 0.25
      %v582 = vmul.f32 %v566, 0.25
      %v583 = vmul.f32 %v567, 0.25
      %v584 = vmul.f32 %v568, 0.25
      %v585 = vmul.f32 %v569, 0.25
      %v586 = vmul.f32 %v570, 0.25
      %v587 = vmul.f32 %v571, 0.25
      %v588 = vmul.f32 %v572, 0.25
      %v589 = vmul.f32 %v573, 0.25
      %v590 = vmul.f32 %v574, 0.25
      %v591 = vmul.f32 %v575, 0.25
      %v592 = vmul.f32 %v576, 0.25
      %v593 = vmul.f32 %v577, 0.25
      %v594 = vmul.f32 %v578, 0.25
      %v595 = vsub.f32 %v467, %v579
      %v596 = vsub.f32 %v468, %v580
      %v597 = vsub.f32 %v469, %v581
      %v598 = vsub.f32 %v470, %v582
      %v599 = vsub.f32 %v471, %v583
      %v600 = vsub.f32 %v472, %v584
      %v601 = vsub.f32 %v473, %v585
      %v602 = vsub.f32 %v474, %v586
      %v603 = vsub.f32 %v475, %v587
      %v604 = vsub.f32 %v476, %v588
      %v605 = vsub.f32 %v477, %v589
      %v606 = vsub.f32 %v478, %v590
      %v607 = vsub.f32 %v479, %v591
      %v608 = vsub.f32 %v480, %v592
      %v609 = vsub.f32 %v481, %v593
      %v610 = vsub.f32 %v482, %v594
      %v611 = vmul.f32 %v595, %v595
      %v612 = vmul.f32 %v596, %v596
      %v613 = vmul.f32 %v597, %v597
      %v614 = vmul.f32 %v598, %v598
      %v615 = vmul.f32 %v599, %v599
      %v616 = vmul.f32 %v600, %v600
      %v617 = vmul.f32 %v601, %v601
      %v618 = vmul.f32 %v602, %v602
      %v619 = vmul.f32 %v603, %v603
      %v620 = vmul.f32 %v604, %v604
      %v621 = vmul.f32 %v605, %v605
      %v622 = vmul.f32 %v606, %v606
      %v623 = vmul.f32 %v607, %v607
      %v624 = vmul.f32 %v608, %v608
      %v625 = vmul.f32 %v609, %v609
      %v626 = vmul.f32 %v610, %v610
      %v627 = vrot.slane %v611, 6
      %v628 = vrot.slane %v612, 6
      %v629 = vrot.slane %v613, 6
      %v630 = vrot.slane %v614, 6
      %v631 = vrot.slane %v615, 6
      %v632 = vrot.slane %v616, 6
      %v633 = vrot.slane %v617, 6
      %v634 = vrot.slane %v618, 6
      %v635 = vrot.slane %v619, 6
      %v636 = vrot.slane %v620, 6
      %v637 = vrot.slane %v621, 6
      %v638 = vrot.slane %v622, 6
      %v639 = vrot.slane %v623, 6
      %v640 = vrot.slane %v624, 6
      %v641 = vrot.slane %v625, 6
      %v642 = vrot.slane %v626, 6
      %v643 = vadd.f32 %v611, %v627
      %v644 = vadd.f32 %v612, %v628
      %v645 = vadd.f32 %v613, %v629
      %v646 = vadd.f32 %v614, %v630
      %v647 = vadd.f32 %v615, %v631
      %v648 = vadd.f32 %v616, %v632
      %v649 = vadd.f32 %v617, %v633
      %v650 = vadd.f32 %v618, %v634
      %v651 = vadd.f32 %v619, %v635
      %v652 = vadd.f32 %v620, %v636
      %v653 = vadd.f32 %v621, %v637
      %v654 = vadd.f32 %v622, %v638
      %v655 = vadd.f32 %v623, %v639
      %v656 = vadd.f32 %v624, %v640
      %v657 = vadd.f32 %v625, %v641
      %v658 = vadd.f32 %v626, %v642
      %v659 = vrot.slane %v611, 4
      %v660 = vrot.slane %v612, 4
      %v661 = vrot.slane %v613, 4
      %v662 = vrot.slane %v614, 4
      %v663 = vrot.slane %v615, 4
      %v664 = vrot.slane %v616, 4
      %v665 = vrot.slane %v617, 4
      %v666 = vrot.slane %v618, 4
      %v667 = vrot.slane %v619, 4
      %v668 = vrot.slane %v620, 4
      %v669 = vrot.slane %v621, 4
      %v670 = vrot.slane %v622, 4
      %v671 = vrot.slane %v623, 4
      %v672 = vrot.slane %v624, 4
      %v673 = vrot.slane %v625, 4
      %v674 = vrot.slane %v626, 4
      %v675 = vadd.f32 %v643, %v659
      %v676 = vadd.f32 %v644, %v660
      %v677 = vadd.f32 %v645, %v661
      %v678 = vadd.f32 %v646, %v662
      %v679 = vadd.f32 %v647, %v663
      %v680 = vadd.f32 %v648, %v664
      %v681 = vadd.f32 %v649, %v665
      %v682 = vadd.f32 %v650, %v666
      %v683 = vadd.f32 %v651, %v667
      %v684 = vadd.f32 %v652, %v668
      %v685 = vadd.f32 %v653, %v669
      %v686 = vadd.f32 %v654, %v670
      %v687 = vadd.f32 %v655, %v671
      %v688 = vadd.f32 %v656, %v672
      %v689 = vadd.f32 %v657, %v673
      %v690 = vadd.f32 %v658, %v674
      %v691 = vrot.slane %v611, 2
      %v692 = vrot.slane %v612, 2
      %v693 = vrot.slane %v613, 2
      %v694 = vrot.slane %v614, 2
      %v695 = vrot.slane %v615, 2
      %v696 = vrot.slane %v616, 2
      %v697 = vrot.slane %v617, 2
      %v698 = vrot.slane %v618, 2
      %v699 = vrot.slane %v619, 2
      %v700 = vrot.slane %v620, 2
      %v701 = vrot.slane %v621, 2
      %v702 = vrot.slane %v622, 2
      %v703 = vrot.slane %v623, 2
      %v704 = vrot.slane %v624, 2
      %v705 = vrot.slane %v625, 2
      %v706 = vrot.slane %v626, 2
      %v707 = vadd.f32 %v675, %v691
      %v708 = vadd.f32 %v676, %v692
      %v709 = vadd.f32 %v677, %v693
      %v710 = vadd.f32 %v678, %v694
      %v711 = vadd.f32 %v679, %v695
      %v712 = vadd.f32 %v680, %v696
      %v713 = vadd.f32 %v681, %v697
      %v714 = vadd.f32 %v682, %v698
      %v715 = vadd.f32 %v683, %v699
      %v716 = vadd.f32 %v684, %v700
      %v717 = vadd.f32 %v685, %v701
      %v718 = vadd.f32 %v686, %v702
      %v719 = vadd.f32 %v687, %v703
      %v720 = vadd.f32 %v688, %v704
      %v721 = vadd.f32 %v689, %v705
      %v722 = vadd.f32 %v690, %v706
      %v723 = vmul.f32 %v707, 0.25
      %v724 = vmul.f32 %v708, 0.25
      %v725 = vmul.f32 %v709, 0.25
      %v726 = vmul.f32 %v710, 0.25
      %v727 = vmul.f32 %v711, 0.25
      %v728 = vmul.f32 %v712, 0.25
      %v729 = vmul.f32 %v713, 0.25
      %v730 = vmul.f32 %v714, 0.25
      %v731 = vmul.f32 %v715, 0.25
      %v732 = vmul.f32 %v716, 0.25
      %v733 = vmul.f32 %v717, 0.25
      %v734 = vmul.f32 %v718, 0.25
      %v735 = vmul.f32 %v719, 0.25
      %v736 = vmul.f32 %v720, 0.25
      %v737 = vmul.f32 %v721, 0.25
      %v738 = vmul.f32 %v722, 0.25
      %v739 = vadd.f32 %v723, 1e-08
      %v740 = vadd.f32 %v724, 1e-08
      %v741 = vadd.f32 %v725, 1e-08
      %v742 = vadd.f32 %v726, 1e-08
      %v743 = vadd.f32 %v727, 1e-08
      %v744 = vadd.f32 %v728, 1e-08
      %v745 = vadd.f32 %v729, 1e-08
      %v746 = vadd.f32 %v730, 1e-08
      %v747 = vadd.f32 %v731, 1e-08
      %v748 = vadd.f32 %v732, 1e-08
      %v749 = vadd.f32 %v733, 1e-08
      %v750 = vadd.f32 %v734, 1e-08
      %v751 = vadd.f32 %v735, 1e-08
      %v752 = vadd.f32 %v736, 1e-08
      %v753 = vadd.f32 %v737, 1e-08
      %v754 = vadd.f32 %v738, 1e-08
      %v755 = vrsqrt.pop %v739
      %v756 = vmul.f32 %v739, %v755
      %vm757 = vcmp.eq.f32.partialorder %v739, inf
      %v758 = vsel %vm757, %v739, %v756
      %vm759 = vcmp.eq.f32.partialorder %v739, 0.0
      %v760 = vand.u32 %v739, 2147483648
      %v761 = vsel %vm759, %v760, %v758
      %v762 = vrsqrt.pop %v740
      %v763 = vmul.f32 %v740, %v762
      %vm764 = vcmp.eq.f32.partialorder %v740, inf
      %v765 = vsel %vm764, %v740, %v763
      %vm766 = vcmp.eq.f32.partialorder %v740, 0.0
      %v767 = vand.u32 %v740, 2147483648
      %v768 = vsel %vm766, %v767, %v765
      %v769 = vrsqrt.pop %v741
      %v770 = vmul.f32 %v741, %v769
      %vm771 = vcmp.eq.f32.partialorder %v741, inf
      %v772 = vsel %vm771, %v741, %v770
      %vm773 = vcmp.eq.f32.partialorder %v741, 0.0
      %v774 = vand.u32 %v741, 2147483648
      %v775 = vsel %vm773, %v774, %v772
      %v776 = vrsqrt.pop %v742
      %v777 = vmul.f32 %v742, %v776
      %vm778 = vcmp.eq.f32.partialorder %v742, inf
      %v779 = vsel %vm778, %v742, %v777
      %vm780 = vcmp.eq.f32.partialorder %v742, 0.0
      %v781 = vand.u32 %v742, 2147483648
      %v782 = vsel %vm780, %v781, %v779
      %v783 = vrsqrt.pop %v743
      %v784 = vmul.f32 %v743, %v783
      %vm785 = vcmp.eq.f32.partialorder %v743, inf
      %v786 = vsel %vm785, %v743, %v784
      %vm787 = vcmp.eq.f32.partialorder %v743, 0.0
      %v788 = vand.u32 %v743, 2147483648
      %v789 = vsel %vm787, %v788, %v786
      %v790 = vrsqrt.pop %v744
      %v791 = vmul.f32 %v744, %v790
      %vm792 = vcmp.eq.f32.partialorder %v744, inf
      %v793 = vsel %vm792, %v744, %v791
      %vm794 = vcmp.eq.f32.partialorder %v744, 0.0
      %v795 = vand.u32 %v744, 2147483648
      %v796 = vsel %vm794, %v795, %v793
      %v797 = vrsqrt.pop %v745
      %v798 = vmul.f32 %v745, %v797
      %vm799 = vcmp.eq.f32.partialorder %v745, inf
      %v800 = vsel %vm799, %v745, %v798
      %vm801 = vcmp.eq.f32.partialorder %v745, 0.0
      %v802 = vand.u32 %v745, 2147483648
      %v803 = vsel %vm801, %v802, %v800
      %v804 = vrsqrt.pop %v746
      %v805 = vmul.f32 %v746, %v804
      %vm806 = vcmp.eq.f32.partialorder %v746, inf
      %v807 = vsel %vm806, %v746, %v805
      %vm808 = vcmp.eq.f32.partialorder %v746, 0.0
      %v809 = vand.u32 %v746, 2147483648
      %v810 = vsel %vm808, %v809, %v807
      %v811 = vrsqrt.pop %v747
      %v812 = vmul.f32 %v747, %v811
      %vm813 = vcmp.eq.f32.partialorder %v747, inf
      %v814 = vsel %vm813, %v747, %v812
      %vm815 = vcmp.eq.f32.partialorder %v747, 0.0
      %v816 = vand.u32 %v747, 2147483648
      %v817 = vsel %vm815, %v816, %v814
      %v818 = vrsqrt.pop %v748
      %v819 = vmul.f32 %v748, %v818
      %vm820 = vcmp.eq.f32.partialorder %v748, inf
      %v821 = vsel %vm820, %v748, %v819
      %vm822 = vcmp.eq.f32.partialorder %v748, 0.0
      %v823 = vand.u32 %v748, 2147483648
      %v824 = vsel %vm822, %v823, %v821
      %v825 = vrsqrt.pop %v749
      %v826 = vmul.f32 %v749, %v825
      %vm827 = vcmp.eq.f32.partialorder %v749, inf
      %v828 = vsel %vm827, %v749, %v826
      %vm829 = vcmp.eq.f32.partialorder %v749, 0.0
      %v830 = vand.u32 %v749, 2147483648
      %v831 = vsel %vm829, %v830, %v828
      %v832 = vrsqrt.pop %v750
      %v833 = vmul.f32 %v750, %v832
      %vm834 = vcmp.eq.f32.partialorder %v750, inf
      %v835 = vsel %vm834, %v750, %v833
      %vm836 = vcmp.eq.f32.partialorder %v750, 0.0
      %v837 = vand.u32 %v750, 2147483648
      %v838 = vsel %vm836, %v837, %v835
      %v839 = vrsqrt.pop %v751
      %v840 = vmul.f32 %v751, %v839
      %vm841 = vcmp.eq.f32.partialorder %v751, inf
      %v842 = vsel %vm841, %v751, %v840
      %vm843 = vcmp.eq.f32.partialorder %v751, 0.0
      %v844 = vand.u32 %v751, 2147483648
      %v845 = vsel %vm843, %v844, %v842
      %v846 = vrsqrt.pop %v752
      %v847 = vmul.f32 %v752, %v846
      %vm848 = vcmp.eq.f32.partialorder %v752, inf
      %v849 = vsel %vm848, %v752, %v847
      %vm850 = vcmp.eq.f32.partialorder %v752, 0.0
      %v851 = vand.u32 %v752, 2147483648
      %v852 = vsel %vm850, %v851, %v849
      %v853 = vrsqrt.pop %v753
      %v854 = vmul.f32 %v753, %v853
      %vm855 = vcmp.eq.f32.partialorder %v753, inf
      %v856 = vsel %vm855, %v753, %v854
      %vm857 = vcmp.eq.f32.partialorder %v753, 0.0
      %v858 = vand.u32 %v753, 2147483648
      %v859 = vsel %vm857, %v858, %v856
      %v860 = vrsqrt.pop %v754
      %v861 = vmul.f32 %v754, %v860
      %vm862 = vcmp.eq.f32.partialorder %v754, inf
      %v863 = vsel %vm862, %v754, %v861
      %vm864 = vcmp.eq.f32.partialorder %v754, 0.0
      %v865 = vand.u32 %v754, 2147483648
      %v866 = vsel %vm864, %v865, %v863
      %v867 = vlaneseq
      %v868 = vand.u32 %v867, 127
      %v869 = vadd.s32 %v868, 128
      %v870 = vadd.s32 %v868, 256
      %v871 = vadd.s32 %v868, 384
      %v872 = vadd.s32 %v868, 512
      %v873 = vadd.s32 %v868, 640
      %v874 = vadd.s32 %v868, 768
      %v875 = vadd.s32 %v868, 896
      %v876 = vadd.s32 %v868, 1024
      %v877 = vadd.s32 %v868, 1152
      %v878 = vadd.s32 %v868, 1280
      %v879 = vadd.s32 %v868, 1408
      %v880 = vadd.s32 %v868, 1536
      %v881 = vadd.s32 %v868, 1664
      %v882 = vadd.s32 %v868, 1792
      %v883 = vadd.s32 %v868, 1920
      %vm884 = vcmp.lt.s32.totalorder %v868, 1024
      %vm885 = vcmp.lt.s32.totalorder %v869, 1024
      %vm886 = vcmp.lt.s32.totalorder %v870, 1024
      %vm887 = vcmp.lt.s32.totalorder %v871, 1024
      %vm888 = vcmp.lt.s32.totalorder %v872, 1024
      %vm889 = vcmp.lt.s32.totalorder %v873, 1024
      %vm890 = vcmp.lt.s32.totalorder %v874, 1024
      %vm891 = vcmp.lt.s32.totalorder %v875, 1024
      %vm892 = vcmp.lt.s32.totalorder %v876, 1024
      %vm893 = vcmp.lt.s32.totalorder %v877, 1024
      %vm894 = vcmp.lt.s32.totalorder %v878, 1024
      %vm895 = vcmp.lt.s32.totalorder %v879, 1024
      %vm896 = vcmp.lt.s32.totalorder %v880, 1024
      %vm897 = vcmp.lt.s32.totalorder %v881, 1024
      %vm898 = vcmp.lt.s32.totalorder %v882, 1024
      %vm899 = vcmp.lt.s32.totalorder %v883, 1024
      %v900 = vld [vmem:[#allocation2] sm:$0xff]
      %v901 = vsel %vm884, %v761, 0.0
      %v902 = vsel %vm885, %v768, 0.0
      %v903 = vsel %vm886, %v775, 0.0
      %v904 = vsel %vm887, %v782, 0.0
      %v905 = vsel %vm888, %v789, 0.0
      %v906 = vsel %vm889, %v796, 0.0
      %v907 = vsel %vm890, %v803, 0.0
      %v908 = vsel %vm891, %v810, 0.0
      %v909 = vsel %vm892, %v817, 0.0
      %v910 = vsel %vm893, %v824, 0.0
      %v911 = vsel %vm894, %v831, 0.0
      %v912 = vsel %vm895, %v838, 0.0
      %v913 = vsel %vm896, %v845, 0.0
      %v914 = vsel %vm897, %v852, 0.0
      %v915 = vsel %vm898, %v859, 0.0
      %v916 = vsel %vm899, %v866, 0.0
      %v917 = vadd.f32 %v901, %v909
      %v918 = vadd.f32 %v902, %v910
      %v919 = vadd.f32 %v903, %v911
      %v920 = vadd.f32 %v904, %v912
      %v921 = vadd.f32 %v905, %v913
      %v922 = vadd.f32 %v906, %v914
      %v923 = vadd.f32 %v907, %v915
      %v924 = vadd.f32 %v908, %v916
      %v925 = vadd.f32 %v917, %v921
      %v926 = vadd.f32 %v918, %v922
      %v927 = vadd.f32 %v919, %v923
      %v928 = vadd.f32 %v920, %v924
      %v929 = vadd.f32 %v925, %v927
      %v930 = vadd.f32 %v926, %v928
      %v931 = vadd.f32 %v929, %v930
      %v932 = vadd.f32 %v900, %v931
      %933 = vst [vmem:[#allocation2] sm:$0xff] %v932
      %v934 = vld [vmem:[#allocation2] sm:$0xff]
      %935 = vadd.xlane.f32.xlu0 %v934
      %v936 = vpop.xlane.xlu0 %935
      %v937 = vmul.f32 %v936, 0.0009765625
      %v938 = vsel %vm884, %v467, %v937
      %v939 = vsel %vm885, %v468, %v937
      %v940 = vsel %vm886, %v469, %v937
      %v941 = vsel %vm887, %v470, %v937
      %v942 = vsel %vm888, %v471, %v937
      %v943 = vsel %vm889, %v472, %v937
      %v944 = vsel %vm890, %v473, %v937
      %v945 = vsel %vm891, %v474, %v937
      %v946 = vsel %vm892, %v475, %v937
      %v947 = vsel %vm893, %v476, %v937
      %v948 = vsel %vm894, %v477, %v937
      %v949 = vsel %vm895, %v478, %v937
      %v950 = vsel %vm896, %v479, %v937
      %v951 = vsel %vm897, %v480, %v937
      %v952 = vsel %vm898, %v481, %v937
      %v953 = vsel %vm899, %v482, %v937
      %954 = vst [vmem:[#allocation6] sm:$0xff] %v938
      %955 = vst [vmem:[#allocation6 + $0x8] sm:$0xff] %v939
      %956 = vst [vmem:[#allocation6 + $0x10] sm:$0xff] %v940
      %957 = vst [vmem:[#allocation6 + $0x18] sm:$0xff] %v941
      %958 = vst [vmem:[#allocation6 + $0x20] sm:$0xff] %v942
      %959 = vst [vmem:[#allocation6 + $0x28] sm:$0xff] %v943
      %960 = vst [vmem:[#allocation6 + $0x30] sm:$0xff] %v944
      %961 = vst [vmem:[#allocation6 + $0x38] sm:$0xff] %v945
      %962 = vst [vmem:[#allocation6 + $0x40] sm:$0xff] %v946
      %963 = vst [vmem:[#allocation6 + $0x48] sm:$0xff] %v947
      %964 = vst [vmem:[#allocation6 + $0x50] sm:$0xff] %v948
      %965 = vst [vmem:[#allocation6 + $0x58] sm:$0xff] %v949
      %966 = vst [vmem:[#allocation6 + $0x60] sm:$0xff] %v950
      %967 = vst [vmem:[#allocation6 + $0x68] sm:$0xff] %v951
      %968 = vst [vmem:[#allocation6 + $0x70] sm:$0xff] %v952
      %969 = vst [vmem:[#allocation6 + $0x78] sm:$0xff] %v953
    $region21: #{tpu_custom_call.1} parent=1 // pred_fallthru
      _
    %p970 = scmp.ge.s32.totalorder 0, 1
    // Predicated region
    $region22: #{tpu_custom_call.1} parent=1 // pred_check
      %p971 = pneg %p970
    $region23: #{tpu_custom_call.1} parent=1 // pred_check_branch
      %973 = sbr.rel (%p971) target = $region25
    $region24: #{tpu_custom_call.1} parent=1 // pred_region
      %v974 = vld [vmem:[#allocation2] sm:$0xff]
      %975 = vadd.xlane.f32.xlu0 %v974
      %v976 = vpop.xlane.xlu0 %975
      %v977 = vmul.f32 %v976, 0.0009765625
      %978 = vst [vmem:[#allocation6] sm:$0xff] %v977
      %979 = vst [vmem:[#allocation6 + $0x8] sm:$0xff] %v977
      %980 = vst [vmem:[#allocation6 + $0x10] sm:$0xff] %v977
      %981 = vst [vmem:[#allocation6 + $0x18] sm:$0xff] %v977
      %982 = vst [vmem:[#allocation6 + $0x20] sm:$0xff] %v977
      %983 = vst [vmem:[#allocation6 + $0x28] sm:$0xff] %v977
      %984 = vst [vmem:[#allocation6 + $0x30] sm:$0xff] %v977
      %985 = vst [vmem:[#allocation6 + $0x38] sm:$0xff] %v977
      %986 = vst [vmem:[#allocation6 + $0x40] sm:$0xff] %v977
      %987 = vst [vmem:[#allocation6 + $0x48] sm:$0xff] %v977
      %988 = vst [vmem:[#allocation6 + $0x50] sm:$0xff] %v977
      %989 = vst [vmem:[#allocation6 + $0x58] sm:$0xff] %v977
      %990 = vst [vmem:[#allocation6 + $0x60] sm:$0xff] %v977
      %991 = vst [vmem:[#allocation6 + $0x68] sm:$0xff] %v977
      %992 = vst [vmem:[#allocation6 + $0x70] sm:$0xff] %v977
      %993 = vst [vmem:[#allocation6 + $0x78] sm:$0xff] %v977
    $region25: #{tpu_custom_call.1} parent=1 // pred_fallthru
      _
    // Predicated region
    $region26: #{tpu_custom_call.1} parent=1 // pred_check
      _
    $region27: #{tpu_custom_call.1} parent=1 // pred_check_branch
      %995 = sbr.rel (0) target = $region29
    $region28: #{tpu_custom_call.1} parent=1 // pred_region
      %s997 = ssub.s32 2048, 1280
      %998 = vsyncadd [#allocation5], %s997
      %s1000 = sshll.u32 [#allocation6], 4
      %s1001 = int_to_ptr.vmem [resolvable:$true] %s1000
      %1003 = dma.vmem_to_hbm [thread:$0]  %s1001, 1280, %s1, [#allocation5]
    $region29: #{tpu_custom_call.1} parent=1 // pred_fallthru
      _
    // Predicated region
    $region30: #{tpu_custom_call.1} parent=1 // pred_check
      _
    $region31: #{tpu_custom_call.1} parent=1 // pred_check_branch
      %1005 = sbr.rel (0) target = $region33
    $region32: #{tpu_custom_call.1} parent=1 // pred_region
      %1006 = dma.done [#allocation5], 2048
    $region33: #{tpu_custom_call.1} parent=1 // pred_fallthru
      _
    %1007 = vsyncpa [#allocation4], 1
    %1008 = vsyncpa [#allocation5], 1

</llo_original>
